<compile_context>
chip_gen: v7x
topology: tpu7x:2x2x1
jax: 0.10.0
libtpu: 0.0.40
codegen_flags: <defaults>
</compile_context>

<pallas_src>
import functools

import jax
import jax.numpy as jnp
from jax.experimental import pallas as pl
from jax.experimental.pallas import tpu as pltpu


def _round_up(n, m):
    return (n + m - 1) // m * m


def _cdiv(a, b):
    return -(-a // b)


def _choose_tile(B, block_b):
    """Batch tile: multiple of 8, <= block_b, preferring an even step count (v7x megacore)."""
    tb = min(block_b, _round_up(B, 8))
    steps = _cdiv(B, tb)
    if steps > 1 and steps % 2 == 1:
        tb_even = _round_up(_cdiv(B, steps + 1), 8)
        if tb_even >= 8:
            tb = tb_even
    return tb


def mlp_kernel(x_ref, w1_ref, b1_ref, w2_ref, b2_ref, o_ref):
    # net1: x @ W1 + b1, then ReLU. Small contraction dims are padded internally
    # by the compiler; compute is irrelevant here (memory-bound kernel).
    h = jnp.dot(x_ref[...], w1_ref[...],
                preferred_element_type=jnp.float32,
                precision=jax.lax.Precision.HIGHEST)
    h = jnp.maximum(h + b1_ref[...], 0.0)
    # net2: h @ W2 + b2
    y = jnp.dot(h, w2_ref[...],
                preferred_element_type=jnp.float32,
                precision=jax.lax.Precision.HIGHEST)
    o_ref[...] = (y + b2_ref[...]).astype(o_ref.dtype)


@functools.partial(jax.jit, static_argnames=("block_b",))
def _forward_pallas(x, w1, b1, w2, b2, *, block_b):
    B, d_in = x.shape
    d_hid = w1.shape[1]
    d_out = w2.shape[1]

    tb = _choose_tile(B, block_b)
    grid = (_cdiv(B, tb),)

    # Advisory cost hint so XLA schedules the custom call sensibly.
    flops = 2 * B * (d_in * d_hid + d_hid * d_out)
    bytes_accessed = 4 * (B * d_in + B * d_out
                          + d_in * d_hid + d_hid + d_hid * d_out + d_out)

    # TODO(synk): if a profile ever shows exposed DMA latency on the tiny
    # per-step transfers, add pipeline_mode=pl.Buffered(3) on the x BlockSpec.
    return pl.pallas_call(
        mlp_kernel,
        out_shape=jax.ShapeDtypeStruct((B, d_out), x.dtype),
        grid_spec=pl.GridSpec(
            grid=grid,
            in_specs=[
                pl.BlockSpec((tb, d_in), lambda i: (i, 0)),       # x: batch-tiled, narrow
                pl.BlockSpec((d_in, d_hid), lambda i: (0, 0)),    # w1: resident
                pl.BlockSpec((1, d_hid), lambda i: (0, 0)),       # b1: resident
                pl.BlockSpec((d_hid, d_out), lambda i: (0, 0)),   # w2: resident
                pl.BlockSpec((1, d_out), lambda i: (0, 0)),       # b2: resident
            ],
            out_specs=pl.BlockSpec((tb, d_out), lambda i: (i, 0)),
        ),
        compiler_params=pltpu.CompilerParams(
            # Batch axis is independent -> megacore-shardable on v7x.
            dimension_semantics=("parallel",),
        ),
        cost_estimate=pl.CostEstimate(
            flops=flops, transcendentals=0, bytes_accessed=bytes_accessed),
    )(x, w1, b1, w2, b2)


def my_model_forward(x, w1, b1, w2, b2, *, block_b=4096, force_pallas=False):
    """Forward pass of MyModel.

    x: (B, 10); w1: (10, 10) stored as (in, out) so x @ w1 == PyTorch x @ W1.T;
    b1: (1, 10); w2: (10, 5); b2: (1, 5).
    """
    B = x.shape[0]
    if B < 256 and not force_pallas:
        # Tiny batch: the Pallas grid is a serial loop on one TC and the whole
        # call is fixed overhead — let XLA fuse the two dots instead.
        h = jnp.maximum(jnp.dot(x, w1, precision=jax.lax.Precision.HIGHEST) + b1, 0.0)
        return jnp.dot(h, w2, precision=jax.lax.Precision.HIGHEST) + b2
    return _forward_pallas(x, w1, b1, w2, b2, block_b=block_b)


if __name__ == "__main__":
    key = jax.random.PRNGKey(0)
    k_x, k_w1, k_b1, k_w2, k_b2, k_big = jax.random.split(key, 6)

    B, D_IN, D_HID, D_OUT = 8, 10, 10, 5

    x = jax.random.normal(k_x, (B, D_IN), dtype=jnp.float32)

    # Deterministic param init (uniform, roughly like PyTorch's default Linear init).
    bound1 = 1.0 / (D_IN ** 0.5)
    w1 = jax.random.uniform(k_w1, (D_IN, D_HID), jnp.float32, -bound1, bound1)
    b1 = jax.random.uniform(k_b1, (1, D_HID), jnp.float32, -bound1, bound1)

    bound2 = 1.0 / (D_HID ** 0.5)
    w2 = jax.random.uniform(k_w2, (D_HID, D_OUT), jnp.float32, -bound2, bound2)
    b2 = jax.random.uniform(k_b2, (1, D_OUT), jnp.float32, -bound2, bound2)

    def ref_fn(xx):
        h = jnp.maximum(
            jnp.dot(xx, w1, precision=jax.lax.Precision.HIGHEST) + b1, 0.0)
        return jnp.dot(h, w2, precision=jax.lax.Precision.HIGHEST) + b2

    # Small-batch check: force the Pallas path so the kernel itself is exercised.
    out = my_model_forward(x, w1, b1, w2, b2, force_pallas=True)
    jax.block_until_ready(out)
    assert out.shape == (B, D_OUT)
    assert jnp.allclose(out, ref_fn(x), atol=1e-5, rtol=1e-5)

    # Larger, non-multiple-of-tile batch: multi-step grid + masked edge block.
    x_big = jax.random.normal(k_big, (1051, D_IN), dtype=jnp.float32)
    out_big = my_model_forward(x_big, w1, b1, w2, b2, block_b=512)
    jax.block_until_ready(out_big)
    assert out_big.shape == (x_big.shape[0], D_OUT)
    assert jnp.allclose(out_big, ref_fn(x_big), atol=1e-5, rtol=1e-5)

    print("KERNEL_OK")
</pallas_src>

<mosaic_0001>
module attributes {stable_mosaic.version = 11 : i64} {
  func.func @mlp_kernel(%arg0: i32, %arg1: memref<8x10xf32, #tpu.memory_space<vmem>>, %arg2: memref<10x10xf32, #tpu.memory_space<vmem>>, %arg3: memref<1x10xf32, #tpu.memory_space<vmem>>, %arg4: memref<10x5xf32, #tpu.memory_space<vmem>>, %arg5: memref<1x5xf32, #tpu.memory_space<vmem>>, %arg6: memref<8x5xf32, #tpu.memory_space<vmem>>) attributes {dimension_semantics = [#tpu.dimension_semantics<parallel>], iteration_bounds = array<i64: 1>, scalar_prefetch = 0 : i64, scratch_operands = 0 : i64, tpu.core_type = #tpu.core_type<tc>, window_params = [{transform_indices = @transform_0, window_bounds = array<i64: 8, 10>}, {pipeline_mode = #tpu.pipeline_mode<synchronous>, transform_indices = @transform_1, window_bounds = array<i64: 10, 10>}, {pipeline_mode = #tpu.pipeline_mode<synchronous>, transform_indices = @transform_2, window_bounds = array<i64: 1, 10>}, {pipeline_mode = #tpu.pipeline_mode<synchronous>, transform_indices = @transform_3, window_bounds = array<i64: 10, 5>}, {pipeline_mode = #tpu.pipeline_mode<synchronous>, transform_indices = @transform_4, window_bounds = array<i64: 1, 5>}, {transform_indices = @transform_5, window_bounds = array<i64: 8, 5>}]} {
    %c0 = arith.constant 0 : index
    %c0_0 = arith.constant 0 : index
    %0 = vector.load %arg1[%c0, %c0_0] : memref<8x10xf32, #tpu.memory_space<vmem>>, vector<8x10xf32>
    %c0_1 = arith.constant 0 : index
    %c0_2 = arith.constant 0 : index
    %1 = vector.load %arg2[%c0_1, %c0_2] : memref<10x10xf32, #tpu.memory_space<vmem>>, vector<10x10xf32>
    %cst = arith.constant dense<0.000000e+00> : vector<8x10xf32>
    %2 = tpu.matmul %0, %1, %cst {dimension_numbers = #tpu.dot_dimension_numbers<[1], [0], [0], [1], [0, 0, 1, 1], [], []>, precision = #tpu.contract_precision<fp32>} : vector<8x10xf32>, vector<10x10xf32>, vector<8x10xf32> -> vector<8x10xf32>
    %c0_3 = arith.constant 0 : index
    %c0_4 = arith.constant 0 : index
    %3 = vector.load %arg3[%c0_3, %c0_4] : memref<1x10xf32, #tpu.memory_space<vmem>>, vector<1x10xf32>
    %4 = vector.broadcast %3 : vector<1x10xf32> to vector<8x10xf32>
    %5 = arith.addf %2, %4 : vector<8x10xf32>
    %cst_5 = arith.constant 0.000000e+00 : f32
    %6 = vector.broadcast %cst_5 : f32 to vector<8x10xf32>
    %7 = arith.maximumf %5, %6 : vector<8x10xf32>
    %c0_6 = arith.constant 0 : index
    %c0_7 = arith.constant 0 : index
    %8 = vector.load %arg4[%c0_6, %c0_7] : memref<10x5xf32, #tpu.memory_space<vmem>>, vector<10x5xf32>
    %cst_8 = arith.constant dense<0.000000e+00> : vector<8x5xf32>
    %9 = tpu.matmul %7, %8, %cst_8 {dimension_numbers = #tpu.dot_dimension_numbers<[1], [0], [0], [1], [0, 0, 1, 1], [], []>, precision = #tpu.contract_precision<fp32>} : vector<8x10xf32>, vector<10x5xf32>, vector<8x5xf32> -> vector<8x5xf32>
    %c0_9 = arith.constant 0 : index
    %c0_10 = arith.constant 0 : index
    %10 = vector.load %arg5[%c0_9, %c0_10] : memref<1x5xf32, #tpu.memory_space<vmem>>, vector<1x5xf32>
    %11 = vector.broadcast %10 : vector<1x5xf32> to vector<8x5xf32>
    %12 = arith.addf %9, %11 : vector<8x5xf32>
    %c0_11 = arith.constant 0 : index
    %c0_12 = arith.constant 0 : index
    %13 = vector.load %arg6[%c0_11, %c0_12] : memref<8x5xf32, #tpu.memory_space<vmem>>, vector<8x5xf32>
    tpu.vector_store %arg6[%c0_11, %c0_12], %12 {strides = array<i32>} : memref<8x5xf32, #tpu.memory_space<vmem>>, vector<8x5xf32>,
    return
  }
  func.func @transform_0(%arg0: i32) -> (i32, i32) {
    %c0_i32 = arith.constant 0 : i32
    %c0_i32_0 = arith.constant 0 : i32
    return %arg0, %c0_i32 : i32, i32
  }
  func.func @transform_1(%arg0: i32) -> (i32, i32) {
    %c0_i32 = arith.constant 0 : i32
    %c0_i32_0 = arith.constant 0 : i32
    %c0_i32_1 = arith.constant 0 : i32
    return %c0_i32, %c0_i32_0 : i32, i32
  }
  func.func @transform_2(%arg0: i32) -> (i32, i32) {
    %c0_i32 = arith.constant 0 : i32
    %c0_i32_0 = arith.constant 0 : i32
    %c0_i32_1 = arith.constant 0 : i32
    return %c0_i32, %c0_i32_0 : i32, i32
  }
  func.func @transform_3(%arg0: i32) -> (i32, i32) {
    %c0_i32 = arith.constant 0 : i32
    %c0_i32_0 = arith.constant 0 : i32
    %c0_i32_1 = arith.constant 0 : i32
    return %c0_i32, %c0_i32_0 : i32, i32
  }
  func.func @transform_4(%arg0: i32) -> (i32, i32) {
    %c0_i32 = arith.constant 0 : i32
    %c0_i32_0 = arith.constant 0 : i32
    %c0_i32_1 = arith.constant 0 : i32
    return %c0_i32, %c0_i32_0 : i32, i32
  }
  func.func @transform_5(%arg0: i32) -> (i32, i32) {
    %c0_i32 = arith.constant 0 : i32
    %c0_i32_0 = arith.constant 0 : i32
    return %arg0, %c0_i32 : i32, i32
  }
}

</mosaic_0001>

<llo_original>
// kernel: _forward_pallas.1
$region0: #{_forward_pallas.1}
  #allocation0 [shape = 'u32[]', space=smem, size = 0x4, offset = 0x4, fixed_abs, tag = 'smem constant byte address 0x4 - core index']
  #allocation1 [shape = 'u32[144,128]{1,0:T(1,128)}', space=vmem, size = 0x12000, scoped, tag = 'internal scratch']
  %s0 = inlined_call_operand.vmem [shape: f32[8,10], index: 0, kind: input, shape index: {}]
  %s1 = inlined_call_operand.vmem [shape: f32[10,10], index: 1, kind: input, shape index: {}]
  %s2 = inlined_call_operand.vmem [shape: f32[1,10], index: 2, kind: input, shape index: {}]
  %s3 = inlined_call_operand.vmem [shape: f32[10,5], index: 3, kind: input, shape index: {}]
  %s4 = inlined_call_operand.vmem [shape: f32[1,5], index: 4, kind: input, shape index: {}]
  %s5 = inlined_call_operand.hbm [shape: f32[8,5], index: 5, kind: output, shape index: {}]
  %s6 = sld [smem:[#allocation0]]
  $region30: #{_forward_pallas.1} parent=0
    _
  %s8 = ssub.s32 1, %s6
  %s9 = scalar_select 0, %s8, %s6
  $region1: #{_forward_pallas.1} parent=0
    #allocation2 [shape = 'u8[4096]{0}', space=vmem, size = 0x1000, scoped, tag = 'output window, operand 0, single buffered']
    #allocation3 [shape = 's32[1]{0}', space=sflag, size = 0x4, scoped, tag = 'scoped memory for _forward_pallas.1']
    %10 = vsyncpa [#allocation3], 0
    // Predicated region
    $region2: #{_forward_pallas.1} parent=1 // pred_check
      _
    $region3: #{_forward_pallas.1} parent=1 // pred_check_branch
      %12 = sbr.rel (0) target = $region5
    $region4: #{_forward_pallas.1} parent=1 // pred_region
      _
    $region5: #{_forward_pallas.1} parent=1 // pred_fallthru
      _
    // Predicated region
    $region6: #{_forward_pallas.1} parent=1 // pred_check
      _
    $region7: #{_forward_pallas.1} parent=1 // pred_check_branch
      %14 = sbr.rel (0) target = $region9
    $region8: #{_forward_pallas.1} parent=1 // pred_region
      _
    $region9: #{_forward_pallas.1} parent=1 // pred_fallthru
      _
    // Predicated region
    $region10: #{_forward_pallas.1} parent=1 // pred_check
      _
    $region11: #{_forward_pallas.1} parent=1 // pred_check_branch
      %16 = sbr.rel (0) target = $region13
    $region12: #{_forward_pallas.1} parent=1 // pred_region
      _
    $region13: #{_forward_pallas.1} parent=1 // pred_fallthru
      _
    // Predicated region
    $region14: #{_forward_pallas.1} parent=1 // pred_check
      _
    $region15: #{_forward_pallas.1} parent=1 // pred_check_branch
      %18 = sbr.rel (0) target = $region17
    $region16: #{_forward_pallas.1} parent=1 // pred_region
      _
    $region17: #{_forward_pallas.1} parent=1 // pred_fallthru
      _
    // Predicated region
    $region18: #{_forward_pallas.1} parent=1 // pred_check
      _
    $region19: #{_forward_pallas.1} parent=1 // pred_check_branch
      %20 = sbr.rel (0) target = $region21
    $region20: #{_forward_pallas.1} parent=1 // pred_region
      _
    $region21: #{_forward_pallas.1} parent=1 // pred_fallthru
      _
    %v21 = vld [vmem:[%s0] sm:$0xff]
    %v22 = vld [vmem:[%s1] sm:$0xff]
    %v23 = vld [vmem:[%s1 + $0x8] sm:$0x3]
    %v24 = vld [vmem:[%s2] sm:$0x1]
    %v26 = vlaneseq
    %v27 = vshrl.u32 %v26, 7
    %v28 = vsub.s32 0, %v27
    %v29 = vrot.slane %v24, %v28
    %vm31 = vcmask 80896
    %v33 = vsel %vm31, %v21, 0
    %vm35 = vcmask 1041408
    %v37 = vsel %vm35, %v23, 0
    %39 = vmatprep.subr.mxu0 0.0
    %v40 = vand.u32 %v22, 4294901760
    %41 = vmatpush1.msra.mxu0 %v40
    %42 = vmatprep.subr.mxu0 0.0
    %v43 = vand.u32 %v37, 4294901760
    %44 = vmatpush1.msra.mxu0 %v43
    %45 = vmatprep.subr.mxu0 0.0
    %46 = vmatpush1.msra.mxu0 0.0
    %47 = vmatprep.subr.mxu0 0.0
    %48 = vmatpush1.msra.mxu0 0.0
    %49 = vmatprep.subr.mxu0 0.0
    %50 = vmatpush1.msra.mxu0 0.0
    %51 = vmatprep.subr.mxu0 0.0
    %52 = vmatpush1.msra.mxu0 0.0
    %53 = vmatprep.subr.mxu0 0.0
    %54 = vmatpush1.msra.mxu0 0.0
    %55 = vmatprep.subr.mxu0 0.0
    %56 = vmatpush1.msra.mxu0 0.0
    %57 = vmatprep.subr.mxu0 0.0
    %58 = vmatpush1.msra.mxu0 0.0
    %59 = vmatprep.subr.mxu0 0.0
    %60 = vmatpush1.msra.mxu0 0.0
    %61 = vmatprep.subr.mxu0 0.0
    %62 = vmatpush1.msra.mxu0 0.0
    %63 = vmatprep.subr.mxu0 0.0
    %64 = vmatpush1.msra.mxu0 0.0
    %65 = vmatprep.subr.mxu0 0.0
    %66 = vmatpush1.msra.mxu0 0.0
    %67 = vmatprep.subr.mxu0 0.0
    %68 = vmatpush1.msra.mxu0 0.0
    %69 = vmatprep.subr.mxu0 0.0
    %70 = vmatpush1.msra.mxu0 0.0
    %71 = vmatprep.subr.mxu0 0.0
    %72 = vmatpush1.msra.mxu0 0.0
    %73 = vmatprep.subr.mxu0 0.0
    %74 = vmatpush1.msra.mxu0 0.0
    %75 = vmatprep.subr.mxu0 0.0
    %76 = vmatpush1.msra.mxu0 0.0
    %77 = vmatprep.subr.mxu0 0.0
    %78 = vmatpush1.msra.mxu0 0.0
    %79 = vmatprep.subr.mxu0 0.0
    %80 = vmatpush1.msra.mxu0 0.0
    %81 = vmatprep.subr.mxu0 0.0
    %82 = vmatpush1.msra.mxu0 0.0
    %83 = vmatprep.subr.mxu0 0.0
    %84 = vmatpush1.msra.mxu0 0.0
    %85 = vmatprep.subr.mxu0 0.0
    %86 = vmatpush1.msra.mxu0 0.0
    %87 = vmatprep.subr.mxu0 0.0
    %88 = vmatpush1.msra.mxu0 0.0
    %89 = vmatprep.subr.mxu0 0.0
    %90 = vmatpush1.msra.mxu0 0.0
    %91 = vmatprep.subr.mxu0 0.0
    %92 = vmatpush1.msra.mxu0 0.0
    %93 = vmatprep.subr.mxu0 0.0
    %94 = vmatpush1.msra.mxu0 0.0
    %95 = vmatprep.subr.mxu0 0.0
    %96 = vmatpush1.msra.mxu0 0.0
    %97 = vmatprep.subr.mxu0 0.0
    %98 = vmatpush1.msra.mxu0 0.0
    %99 = vmatprep.subr.mxu0 0.0
    %100 = vmatpush1.msra.mxu0 0.0
    %101 = vmatprep.subr.mxu0 0.0
    %102 = vmatpush1.msra.mxu0 0.0
    %103 = vmatprep.subr.mxu0 0.0
    %104 = vmatpush1.msra.mxu0 0.0
    %105 = vmatprep.mubr.f32.mxu0 0.0
    %v106 = vand.u32 %v33, 4294901760
    %v107 = vsub.f32 %v33, %v106
    %v108 = vand.u32 %v107, 4294901760
    %v109 = vsub.f32 %v107, %v108
    %v110 = vand.u32 %v109, 4294901760
    %111 = vmatmul.mubr.f32.gmra.mrb[0].mxu0 %v110
    %v112 = vpop.f32.mrb[0].mxu0
    %v113 = vadd.f32 %v29, %v112
    %v114 = vpop.f32.mrb[0].mxu0
    %115 = vdwg.mxu0
    %116 = vmatprep.subr.mxu0 0.0
    %v117 = vand.u32 %v22, 4294901760
    %v118 = vsub.f32 %v22, %v117
    %v119 = vand.u32 %v118, 4294901760
    %v120 = vsub.f32 %v118, %v119
    %v121 = vand.u32 %v120, 4294901760
    %122 = vmatpush1.msra.mxu0 %v121
    %123 = vmatprep.subr.mxu0 0.0
    %v124 = vand.u32 %v37, 4294901760
    %v125 = vsub.f32 %v37, %v124
    %v126 = vand.u32 %v125, 4294901760
    %v127 = vsub.f32 %v125, %v126
    %v128 = vand.u32 %v127, 4294901760
    %129 = vmatpush1.msra.mxu0 %v128
    %130 = vmatprep.subr.mxu0 0.0
    %131 = vmatpush1.msra.mxu0 0.0
    %132 = vmatprep.subr.mxu0 0.0
    %133 = vmatpush1.msra.mxu0 0.0
    %134 = vmatprep.subr.mxu0 0.0
    %135 = vmatpush1.msra.mxu0 0.0
    %136 = vmatprep.subr.mxu0 0.0
    %137 = vmatpush1.msra.mxu0 0.0
    %138 = vmatprep.subr.mxu0 0.0
    %139 = vmatpush1.msra.mxu0 0.0
    %140 = vmatprep.subr.mxu0 0.0
    %141 = vmatpush1.msra.mxu0 0.0
    %142 = vmatprep.subr.mxu0 0.0
    %143 = vmatpush1.msra.mxu0 0.0
    %144 = vmatprep.subr.mxu0 0.0
    %145 = vmatpush1.msra.mxu0 0.0
    %146 = vmatprep.subr.mxu0 0.0
    %147 = vmatpush1.msra.mxu0 0.0
    %148 = vmatprep.subr.mxu0 0.0
    %149 = vmatpush1.msra.mxu0 0.0
    %150 = vmatprep.subr.mxu0 0.0
    %151 = vmatpush1.msra.mxu0 0.0
    %152 = vmatprep.subr.mxu0 0.0
    %153 = vmatpush1.msra.mxu0 0.0
    %154 = vmatprep.subr.mxu0 0.0
    %155 = vmatpush1.msra.mxu0 0.0
    %156 = vmatprep.subr.mxu0 0.0
    %157 = vmatpush1.msra.mxu0 0.0
    %158 = vmatprep.subr.mxu0 0.0
    %159 = vmatpush1.msra.mxu0 0.0
    %160 = vmatprep.subr.mxu0 0.0
    %161 = vmatpush1.msra.mxu0 0.0
    %162 = vmatprep.subr.mxu0 0.0
    %163 = vmatpush1.msra.mxu0 0.0
    %164 = vmatprep.subr.mxu0 0.0
    %165 = vmatpush1.msra.mxu0 0.0
    %166 = vmatprep.subr.mxu0 0.0
    %167 = vmatpush1.msra.mxu0 0.0
    %168 = vmatprep.subr.mxu0 0.0
    %169 = vmatpush1.msra.mxu0 0.0
    %170 = vmatprep.subr.mxu0 0.0
    %171 = vmatpush1.msra.mxu0 0.0
    %172 = vmatprep.subr.mxu0 0.0
    %173 = vmatpush1.msra.mxu0 0.0
    %174 = vmatprep.subr.mxu0 0.0
    %175 = vmatpush1.msra.mxu0 0.0
    %176 = vmatprep.subr.mxu0 0.0
    %177 = vmatpush1.msra.mxu0 0.0
    %178 = vmatprep.subr.mxu0 0.0
    %179 = vmatpush1.msra.mxu0 0.0
    %180 = vmatprep.subr.mxu0 0.0
    %181 = vmatpush1.msra.mxu0 0.0
    %182 = vmatprep.subr.mxu0 0.0
    %183 = vmatpush1.msra.mxu0 0.0
    %184 = vmatprep.subr.mxu0 0.0
    %185 = vmatpush1.msra.mxu0 0.0
    %186 = vmatprep.subr.mxu0 0.0
    %187 = vmatpush1.msra.mxu0 0.0
    %188 = vmatprep.subr.mxu0 0.0
    %189 = vmatpush1.msra.mxu0 0.0
    %190 = vmatprep.mubr.f32.mxu0 0.0
    %v191 = vand.u32 %v33, 4294901760
    %192 = vmatmul.mubr.f32.gmra.mrb[0].mxu0 %v191
    %v193 = vpop.f32.mrb[0].mxu0
    %v194 = vadd.f32 %v113, %v193
    %v195 = vpop.f32.mrb[0].mxu0
    %196 = vdwg.mxu0
    %197 = vmatprep.subr.mxu0 0.0
    %v198 = vand.u32 %v22, 4294901760
    %v199 = vsub.f32 %v22, %v198
    %200 = vmatpush1.msra.mxu0 %v199
    %201 = vmatprep.subr.mxu0 0.0
    %v202 = vand.u32 %v37, 4294901760
    %v203 = vsub.f32 %v37, %v202
    %204 = vmatpush1.msra.mxu0 %v203
    %205 = vmatprep.subr.mxu0 0.0
    %206 = vmatpush1.msra.mxu0 0.0
    %207 = vmatprep.subr.mxu0 0.0
    %208 = vmatpush1.msra.mxu0 0.0
    %209 = vmatprep.subr.mxu0 0.0
    %210 = vmatpush1.msra.mxu0 0.0
    %211 = vmatprep.subr.mxu0 0.0
    %212 = vmatpush1.msra.mxu0 0.0
    %213 = vmatprep.subr.mxu0 0.0
    %214 = vmatpush1.msra.mxu0 0.0
    %215 = vmatprep.subr.mxu0 0.0
    %216 = vmatpush1.msra.mxu0 0.0
    %217 = vmatprep.subr.mxu0 0.0
    %218 = vmatpush1.msra.mxu0 0.0
    %219 = vmatprep.subr.mxu0 0.0
    %220 = vmatpush1.msra.mxu0 0.0
    %221 = vmatprep.subr.mxu0 0.0
    %222 = vmatpush1.msra.mxu0 0.0
    %223 = vmatprep.subr.mxu0 0.0
    %224 = vmatpush1.msra.mxu0 0.0
    %225 = vmatprep.subr.mxu0 0.0
    %226 = vmatpush1.msra.mxu0 0.0
    %227 = vmatprep.subr.mxu0 0.0
    %228 = vmatpush1.msra.mxu0 0.0
    %229 = vmatprep.subr.mxu0 0.0
    %230 = vmatpush1.msra.mxu0 0.0
    %231 = vmatprep.subr.mxu0 0.0
    %232 = vmatpush1.msra.mxu0 0.0
    %233 = vmatprep.subr.mxu0 0.0
    %234 = vmatpush1.msra.mxu0 0.0
    %235 = vmatprep.subr.mxu0 0.0
    %236 = vmatpush1.msra.mxu0 0.0
    %237 = vmatprep.subr.mxu0 0.0
    %238 = vmatpush1.msra.mxu0 0.0
    %239 = vmatprep.subr.mxu0 0.0
    %240 = vmatpush1.msra.mxu0 0.0
    %241 = vmatprep.subr.mxu0 0.0
    %242 = vmatpush1.msra.mxu0 0.0
    %243 = vmatprep.subr.mxu0 0.0
    %244 = vmatpush1.msra.mxu0 0.0
    %245 = vmatprep.subr.mxu0 0.0
    %246 = vmatpush1.msra.mxu0 0.0
    %247 = vmatprep.subr.mxu0 0.0
    %248 = vmatpush1.msra.mxu0 0.0
    %249 = vmatprep.subr.mxu0 0.0
    %250 = vmatpush1.msra.mxu0 0.0
    %251 = vmatprep.subr.mxu0 0.0
    %252 = vmatpush1.msra.mxu0 0.0
    %253 = vmatprep.subr.mxu0 0.0
    %254 = vmatpush1.msra.mxu0 0.0
    %255 = vmatprep.subr.mxu0 0.0
    %256 = vmatpush1.msra.mxu0 0.0
    %257 = vmatprep.subr.mxu0 0.0
    %258 = vmatpush1.msra.mxu0 0.0
    %259 = vmatprep.subr.mxu0 0.0
    %260 = vmatpush1.msra.mxu0 0.0
    %261 = vmatprep.subr.mxu0 0.0
    %262 = vmatpush1.msra.mxu0 0.0
    %263 = vmatprep.subr.mxu0 0.0
    %264 = vmatpush1.msra.mxu0 0.0
    %265 = vmatprep.mubr.f32.mxu0 0.0
    %v266 = vand.u32 %v33, 4294901760
    %v267 = vsub.f32 %v33, %v266
    %268 = vmatmul.mubr.f32.gmra.mrb[0].mxu0 %v267
    %v269 = vpop.f32.mrb[0].mxu0
    %v270 = vadd.f32 %v194, %v269
    %v271 = vpop.f32.mrb[0].mxu0
    %272 = vdwg.mxu0
    %273 = vmatprep.subr.mxu0 0.0
    %v274 = vand.u32 %v22, 4294901760
    %275 = vmatpush1.msra.mxu0 %v274
    %276 = vmatprep.subr.mxu0 0.0
    %v277 = vand.u32 %v37, 4294901760
    %278 = vmatpush1.msra.mxu0 %v277
    %279 = vmatprep.subr.mxu0 0.0
    %280 = vmatpush1.msra.mxu0 0.0
    %281 = vmatprep.subr.mxu0 0.0
    %282 = vmatpush1.msra.mxu0 0.0
    %283 = vmatprep.subr.mxu0 0.0
    %284 = vmatpush1.msra.mxu0 0.0
    %285 = vmatprep.subr.mxu0 0.0
    %286 = vmatpush1.msra.mxu0 0.0
    %287 = vmatprep.subr.mxu0 0.0
    %288 = vmatpush1.msra.mxu0 0.0
    %289 = vmatprep.subr.mxu0 0.0
    %290 = vmatpush1.msra.mxu0 0.0
    %291 = vmatprep.subr.mxu0 0.0
    %292 = vmatpush1.msra.mxu0 0.0
    %293 = vmatprep.subr.mxu0 0.0
    %294 = vmatpush1.msra.mxu0 0.0
    %295 = vmatprep.subr.mxu0 0.0
    %296 = vmatpush1.msra.mxu0 0.0
    %297 = vmatprep.subr.mxu0 0.0
    %298 = vmatpush1.msra.mxu0 0.0
    %299 = vmatprep.subr.mxu0 0.0
    %300 = vmatpush1.msra.mxu0 0.0
    %301 = vmatprep.subr.mxu0 0.0
    %302 = vmatpush1.msra.mxu0 0.0
    %303 = vmatprep.subr.mxu0 0.0
    %304 = vmatpush1.msra.mxu0 0.0
    %305 = vmatprep.subr.mxu0 0.0
    %306 = vmatpush1.msra.mxu0 0.0
    %307 = vmatprep.subr.mxu0 0.0
    %308 = vmatpush1.msra.mxu0 0.0
    %309 = vmatprep.subr.mxu0 0.0
    %310 = vmatpush1.msra.mxu0 0.0
    %311 = vmatprep.subr.mxu0 0.0
    %312 = vmatpush1.msra.mxu0 0.0
    %313 = vmatprep.subr.mxu0 0.0
    %314 = vmatpush1.msra.mxu0 0.0
    %315 = vmatprep.subr.mxu0 0.0
    %316 = vmatpush1.msra.mxu0 0.0
    %317 = vmatprep.subr.mxu0 0.0
    %318 = vmatpush1.msra.mxu0 0.0
    %319 = vmatprep.subr.mxu0 0.0
    %320 = vmatpush1.msra.mxu0 0.0
    %321 = vmatprep.subr.mxu0 0.0
    %322 = vmatpush1.msra.mxu0 0.0
    %323 = vmatprep.subr.mxu0 0.0
    %324 = vmatpush1.msra.mxu0 0.0
    %325 = vmatprep.subr.mxu0 0.0
    %326 = vmatpush1.msra.mxu0 0.0
    %327 = vmatprep.subr.mxu0 0.0
    %328 = vmatpush1.msra.mxu0 0.0
    %329 = vmatprep.subr.mxu0 0.0
    %330 = vmatpush1.msra.mxu0 0.0
    %331 = vmatprep.subr.mxu0 0.0
    %332 = vmatpush1.msra.mxu0 0.0
    %333 = vmatprep.subr.mxu0 0.0
    %334 = vmatpush1.msra.mxu0 0.0
    %335 = vmatprep.subr.mxu0 0.0
    %336 = vmatpush1.msra.mxu0 0.0
    %337 = vmatprep.subr.mxu0 0.0
    %338 = vmatpush1.msra.mxu0 0.0
    %339 = vmatprep.mubr.f32.mxu0 0.0
    %v340 = vand.u32 %v33, 4294901760
    %v341 = vsub.f32 %v33, %v340
    %v342 = vand.u32 %v341, 4294901760
    %343 = vmatmul.mubr.f32.gmra.mrb[0].mxu0 %v342
    %v344 = vpop.f32.mrb[0].mxu0
    %v345 = vadd.f32 %v270, %v344
    %v346 = vpop.f32.mrb[0].mxu0
    %347 = vdwg.mxu0
    %348 = vmatprep.subr.mxu0 0.0
    %v349 = vand.u32 %v22, 4294901760
    %v350 = vsub.f32 %v22, %v349
    %v351 = vand.u32 %v350, 4294901760
    %352 = vmatpush1.msra.mxu0 %v351
    %353 = vmatprep.subr.mxu0 0.0
    %v354 = vand.u32 %v37, 4294901760
    %v355 = vsub.f32 %v37, %v354
    %v356 = vand.u32 %v355, 4294901760
    %357 = vmatpush1.msra.mxu0 %v356
    %358 = vmatprep.subr.mxu0 0.0
    %359 = vmatpush1.msra.mxu0 0.0
    %360 = vmatprep.subr.mxu0 0.0
    %361 = vmatpush1.msra.mxu0 0.0
    %362 = vmatprep.subr.mxu0 0.0
    %363 = vmatpush1.msra.mxu0 0.0
    %364 = vmatprep.subr.mxu0 0.0
    %365 = vmatpush1.msra.mxu0 0.0
    %366 = vmatprep.subr.mxu0 0.0
    %367 = vmatpush1.msra.mxu0 0.0
    %368 = vmatprep.subr.mxu0 0.0
    %369 = vmatpush1.msra.mxu0 0.0
    %370 = vmatprep.subr.mxu0 0.0
    %371 = vmatpush1.msra.mxu0 0.0
    %372 = vmatprep.subr.mxu0 0.0
    %373 = vmatpush1.msra.mxu0 0.0
    %374 = vmatprep.subr.mxu0 0.0
    %375 = vmatpush1.msra.mxu0 0.0
    %376 = vmatprep.subr.mxu0 0.0
    %377 = vmatpush1.msra.mxu0 0.0
    %378 = vmatprep.subr.mxu0 0.0
    %379 = vmatpush1.msra.mxu0 0.0
    %380 = vmatprep.subr.mxu0 0.0
    %381 = vmatpush1.msra.mxu0 0.0
    %382 = vmatprep.subr.mxu0 0.0
    %383 = vmatpush1.msra.mxu0 0.0
    %384 = vmatprep.subr.mxu0 0.0
    %385 = vmatpush1.msra.mxu0 0.0
    %386 = vmatprep.subr.mxu0 0.0
    %387 = vmatpush1.msra.mxu0 0.0
    %388 = vmatprep.subr.mxu0 0.0
    %389 = vmatpush1.msra.mxu0 0.0
    %390 = vmatprep.subr.mxu0 0.0
    %391 = vmatpush1.msra.mxu0 0.0
    %392 = vmatprep.subr.mxu0 0.0
    %393 = vmatpush1.msra.mxu0 0.0
    %394 = vmatprep.subr.mxu0 0.0
    %395 = vmatpush1.msra.mxu0 0.0
    %396 = vmatprep.subr.mxu0 0.0
    %397 = vmatpush1.msra.mxu0 0.0
    %398 = vmatprep.subr.mxu0 0.0
    %399 = vmatpush1.msra.mxu0 0.0
    %400 = vmatprep.subr.mxu0 0.0
    %401 = vmatpush1.msra.mxu0 0.0
    %402 = vmatprep.subr.mxu0 0.0
    %403 = vmatpush1.msra.mxu0 0.0
    %404 = vmatprep.subr.mxu0 0.0
    %405 = vmatpush1.msra.mxu0 0.0
    %406 = vmatprep.subr.mxu0 0.0
    %407 = vmatpush1.msra.mxu0 0.0
    %408 = vmatprep.subr.mxu0 0.0
    %409 = vmatpush1.msra.mxu0 0.0
    %410 = vmatprep.subr.mxu0 0.0
    %411 = vmatpush1.msra.mxu0 0.0
    %412 = vmatprep.subr.mxu0 0.0
    %413 = vmatpush1.msra.mxu0 0.0
    %414 = vmatprep.subr.mxu0 0.0
    %415 = vmatpush1.msra.mxu0 0.0
    %416 = vmatprep.subr.mxu0 0.0
    %417 = vmatpush1.msra.mxu0 0.0
    %418 = vmatprep.mubr.f32.mxu0 0.0
    %v419 = vand.u32 %v33, 4294901760
    %420 = vmatmul.mubr.f32.gmra.mrb[0].mxu0 %v419
    %v421 = vpop.f32.mrb[0].mxu0
    %v422 = vadd.f32 %v345, %v421
    %v423 = vpop.f32.mrb[0].mxu0
    %424 = vdwg.mxu0
    %425 = vmatprep.subr.mxu0 0.0
    %v426 = vand.u32 %v22, 4294901760
    %427 = vmatpush1.msra.mxu0 %v426
    %428 = vmatprep.subr.mxu0 0.0
    %v429 = vand.u32 %v37, 4294901760
    %430 = vmatpush1.msra.mxu0 %v429
    %431 = vmatprep.subr.mxu0 0.0
    %432 = vmatpush1.msra.mxu0 0.0
    %433 = vmatprep.subr.mxu0 0.0
    %434 = vmatpush1.msra.mxu0 0.0
    %435 = vmatprep.subr.mxu0 0.0
    %436 = vmatpush1.msra.mxu0 0.0
    %437 = vmatprep.subr.mxu0 0.0
    %438 = vmatpush1.msra.mxu0 0.0
    %439 = vmatprep.subr.mxu0 0.0
    %440 = vmatpush1.msra.mxu0 0.0
    %441 = vmatprep.subr.mxu0 0.0
    %442 = vmatpush1.msra.mxu0 0.0
    %443 = vmatprep.subr.mxu0 0.0
    %444 = vmatpush1.msra.mxu0 0.0
    %445 = vmatprep.subr.mxu0 0.0
    %446 = vmatpush1.msra.mxu0 0.0
    %447 = vmatprep.subr.mxu0 0.0
    %448 = vmatpush1.msra.mxu0 0.0
    %449 = vmatprep.subr.mxu0 0.0
    %450 = vmatpush1.msra.mxu0 0.0
    %451 = vmatprep.subr.mxu0 0.0
    %452 = vmatpush1.msra.mxu0 0.0
    %453 = vmatprep.subr.mxu0 0.0
    %454 = vmatpush1.msra.mxu0 0.0
    %455 = vmatprep.subr.mxu0 0.0
    %456 = vmatpush1.msra.mxu0 0.0
    %457 = vmatprep.subr.mxu0 0.0
    %458 = vmatpush1.msra.mxu0 0.0
    %459 = vmatprep.subr.mxu0 0.0
    %460 = vmatpush1.msra.mxu0 0.0
    %461 = vmatprep.subr.mxu0 0.0
    %462 = vmatpush1.msra.mxu0 0.0
    %463 = vmatprep.subr.mxu0 0.0
    %464 = vmatpush1.msra.mxu0 0.0
    %465 = vmatprep.subr.mxu0 0.0
    %466 = vmatpush1.msra.mxu0 0.0
    %467 = vmatprep.subr.mxu0 0.0
    %468 = vmatpush1.msra.mxu0 0.0
    %469 = vmatprep.subr.mxu0 0.0
    %470 = vmatpush1.msra.mxu0 0.0
    %471 = vmatprep.subr.mxu0 0.0
    %472 = vmatpush1.msra.mxu0 0.0
    %473 = vmatprep.subr.mxu0 0.0
    %474 = vmatpush1.msra.mxu0 0.0
    %475 = vmatprep.subr.mxu0 0.0
    %476 = vmatpush1.msra.mxu0 0.0
    %477 = vmatprep.subr.mxu0 0.0
    %478 = vmatpush1.msra.mxu0 0.0
    %479 = vmatprep.subr.mxu0 0.0
    %480 = vmatpush1.msra.mxu0 0.0
    %481 = vmatprep.subr.mxu0 0.0
    %482 = vmatpush1.msra.mxu0 0.0
    %483 = vmatprep.subr.mxu0 0.0
    %484 = vmatpush1.msra.mxu0 0.0
    %485 = vmatprep.subr.mxu0 0.0
    %486 = vmatpush1.msra.mxu0 0.0
    %487 = vmatprep.subr.mxu0 0.0
    %488 = vmatpush1.msra.mxu0 0.0
    %489 = vmatprep.subr.mxu0 0.0
    %490 = vmatpush1.msra.mxu0 0.0
    %491 = vmatprep.mubr.f32.mxu0 0.0
    %v492 = vand.u32 %v33, 4294901760
    %493 = vmatmul.mubr.f32.gmra.mrb[0].mxu0 %v492
    %v494 = vpop.f32.mrb[0].mxu0
    %v495 = vadd.f32 %v422, %v494
    %v496 = vpop.f32.mrb[0].mxu0
    %497 = vdwg.mxu0
    %v498 = vmax.f32 %v495, 0.0
    %v499 = vld [vmem:[%s3] sm:$0xff]
    %v500 = vld [vmem:[%s3 + $0x8] sm:$0x3]
    %v501 = vld [vmem:[%s4] sm:$0x1]
    %v503 = vlaneseq
    %v504 = vshrl.u32 %v503, 7
    %v505 = vsub.s32 0, %v504
    %v506 = vrot.slane %v501, %v505
    %v509 = vsel %vm31, %v498, 0
    %v512 = vsel %vm35, %v500, 0
    %514 = vmatprep.subr.mxu0 0.0
    %v515 = vand.u32 %v499, 4294901760
    %516 = vmatpush1.msra.mxu0 %v515
    %517 = vmatprep.subr.mxu0 0.0
    %v518 = vand.u32 %v512, 4294901760
    %519 = vmatpush1.msra.mxu0 %v518
    %520 = vmatprep.subr.mxu0 0.0
    %521 = vmatpush1.msra.mxu0 0.0
    %522 = vmatprep.subr.mxu0 0.0
    %523 = vmatpush1.msra.mxu0 0.0
    %524 = vmatprep.subr.mxu0 0.0
    %525 = vmatpush1.msra.mxu0 0.0
    %526 = vmatprep.subr.mxu0 0.0
    %527 = vmatpush1.msra.mxu0 0.0
    %528 = vmatprep.subr.mxu0 0.0
    %529 = vmatpush1.msra.mxu0 0.0
    %530 = vmatprep.subr.mxu0 0.0
    %531 = vmatpush1.msra.mxu0 0.0
    %532 = vmatprep.subr.mxu0 0.0
    %533 = vmatpush1.msra.mxu0 0.0
    %534 = vmatprep.subr.mxu0 0.0
    %535 = vmatpush1.msra.mxu0 0.0
    %536 = vmatprep.subr.mxu0 0.0
    %537 = vmatpush1.msra.mxu0 0.0
    %538 = vmatprep.subr.mxu0 0.0
    %539 = vmatpush1.msra.mxu0 0.0
    %540 = vmatprep.subr.mxu0 0.0
    %541 = vmatpush1.msra.mxu0 0.0
    %542 = vmatprep.subr.mxu0 0.0
    %543 = vmatpush1.msra.mxu0 0.0
    %544 = vmatprep.subr.mxu0 0.0
    %545 = vmatpush1.msra.mxu0 0.0
    %546 = vmatprep.subr.mxu0 0.0
    %547 = vmatpush1.msra.mxu0 0.0
    %548 = vmatprep.subr.mxu0 0.0
    %549 = vmatpush1.msra.mxu0 0.0
    %550 = vmatprep.subr.mxu0 0.0
    %551 = vmatpush1.msra.mxu0 0.0
    %552 = vmatprep.subr.mxu0 0.0
    %553 = vmatpush1.msra.mxu0 0.0
    %554 = vmatprep.subr.mxu0 0.0
    %555 = vmatpush1.msra.mxu0 0.0
    %556 = vmatprep.subr.mxu0 0.0
    %557 = vmatpush1.msra.mxu0 0.0
    %558 = vmatprep.subr.mxu0 0.0
    %559 = vmatpush1.msra.mxu0 0.0
    %560 = vmatprep.subr.mxu0 0.0
    %561 = vmatpush1.msra.mxu0 0.0
    %562 = vmatprep.subr.mxu0 0.0
    %563 = vmatpush1.msra.mxu0 0.0
    %564 = vmatprep.subr.mxu0 0.0
    %565 = vmatpush1.msra.mxu0 0.0
    %566 = vmatprep.subr.mxu0 0.0
    %567 = vmatpush1.msra.mxu0 0.0
    %568 = vmatprep.subr.mxu0 0.0
    %569 = vmatpush1.msra.mxu0 0.0
    %570 = vmatprep.subr.mxu0 0.0
    %571 = vmatpush1.msra.mxu0 0.0
    %572 = vmatprep.subr.mxu0 0.0
    %573 = vmatpush1.msra.mxu0 0.0
    %574 = vmatprep.subr.mxu0 0.0
    %575 = vmatpush1.msra.mxu0 0.0
    %576 = vmatprep.subr.mxu0 0.0
    %577 = vmatpush1.msra.mxu0 0.0
    %578 = vmatprep.subr.mxu0 0.0
    %579 = vmatpush1.msra.mxu0 0.0
    %580 = vmatprep.mubr.f32.mxu0 0.0
    %v581 = vand.u32 %v509, 4294901760
    %v582 = vsub.f32 %v509, %v581
    %v583 = vand.u32 %v582, 4294901760
    %v584 = vsub.f32 %v582, %v583
    %v585 = vand.u32 %v584, 4294901760
    %586 = vmatmul.mubr.f32.gmra.mrb[0].mxu0 %v585
    %v587 = vpop.f32.mrb[0].mxu0
    %v588 = vadd.f32 %v506, %v587
    %v589 = vpop.f32.mrb[0].mxu0
    %590 = vdwg.mxu0
    %591 = vmatprep.subr.mxu0 0.0
    %v592 = vand.u32 %v499, 4294901760
    %v593 = vsub.f32 %v499, %v592
    %v594 = vand.u32 %v593, 4294901760
    %v595 = vsub.f32 %v593, %v594
    %v596 = vand.u32 %v595, 4294901760
    %597 = vmatpush1.msra.mxu0 %v596
    %598 = vmatprep.subr.mxu0 0.0
    %v599 = vand.u32 %v512, 4294901760
    %v600 = vsub.f32 %v512, %v599
    %v601 = vand.u32 %v600, 4294901760
    %v602 = vsub.f32 %v600, %v601
    %v603 = vand.u32 %v602, 4294901760
    %604 = vmatpush1.msra.mxu0 %v603
    %605 = vmatprep.subr.mxu0 0.0
    %606 = vmatpush1.msra.mxu0 0.0
    %607 = vmatprep.subr.mxu0 0.0
    %608 = vmatpush1.msra.mxu0 0.0
    %609 = vmatprep.subr.mxu0 0.0
    %610 = vmatpush1.msra.mxu0 0.0
    %611 = vmatprep.subr.mxu0 0.0
    %612 = vmatpush1.msra.mxu0 0.0
    %613 = vmatprep.subr.mxu0 0.0
    %614 = vmatpush1.msra.mxu0 0.0
    %615 = vmatprep.subr.mxu0 0.0
    %616 = vmatpush1.msra.mxu0 0.0
    %617 = vmatprep.subr.mxu0 0.0
    %618 = vmatpush1.msra.mxu0 0.0
    %619 = vmatprep.subr.mxu0 0.0
    %620 = vmatpush1.msra.mxu0 0.0
    %621 = vmatprep.subr.mxu0 0.0
    %622 = vmatpush1.msra.mxu0 0.0
    %623 = vmatprep.subr.mxu0 0.0
    %624 = vmatpush1.msra.mxu0 0.0
    %625 = vmatprep.subr.mxu0 0.0
    %626 = vmatpush1.msra.mxu0 0.0
    %627 = vmatprep.subr.mxu0 0.0
    %628 = vmatpush1.msra.mxu0 0.0
    %629 = vmatprep.subr.mxu0 0.0
    %630 = vmatpush1.msra.mxu0 0.0
    %631 = vmatprep.subr.mxu0 0.0
    %632 = vmatpush1.msra.mxu0 0.0
    %633 = vmatprep.subr.mxu0 0.0
    %634 = vmatpush1.msra.mxu0 0.0
    %635 = vmatprep.subr.mxu0 0.0
    %636 = vmatpush1.msra.mxu0 0.0
    %637 = vmatprep.subr.mxu0 0.0
    %638 = vmatpush1.msra.mxu0 0.0
    %639 = vmatprep.subr.mxu0 0.0
    %640 = vmatpush1.msra.mxu0 0.0
    %641 = vmatprep.subr.mxu0 0.0
    %642 = vmatpush1.msra.mxu0 0.0
    %643 = vmatprep.subr.mxu0 0.0
    %644 = vmatpush1.msra.mxu0 0.0
    %645 = vmatprep.subr.mxu0 0.0
    %646 = vmatpush1.msra.mxu0 0.0
    %647 = vmatprep.subr.mxu0 0.0
    %648 = vmatpush1.msra.mxu0 0.0
    %649 = vmatprep.subr.mxu0 0.0
    %650 = vmatpush1.msra.mxu0 0.0
    %651 = vmatprep.subr.mxu0 0.0
    %652 = vmatpush1.msra.mxu0 0.0
    %653 = vmatprep.subr.mxu0 0.0
    %654 = vmatpush1.msra.mxu0 0.0
    %655 = vmatprep.subr.mxu0 0.0
    %656 = vmatpush1.msra.mxu0 0.0
    %657 = vmatprep.subr.mxu0 0.0
    %658 = vmatpush1.msra.mxu0 0.0
    %659 = vmatprep.subr.mxu0 0.0
    %660 = vmatpush1.msra.mxu0 0.0
    %661 = vmatprep.subr.mxu0 0.0
    %662 = vmatpush1.msra.mxu0 0.0
    %663 = vmatprep.subr.mxu0 0.0
    %664 = vmatpush1.msra.mxu0 0.0
    %665 = vmatprep.mubr.f32.mxu0 0.0
    %v666 = vand.u32 %v509, 4294901760
    %667 = vmatmul.mubr.f32.gmra.mrb[0].mxu0 %v666
    %v668 = vpop.f32.mrb[0].mxu0
    %v669 = vadd.f32 %v588, %v668
    %v670 = vpop.f32.mrb[0].mxu0
    %671 = vdwg.mxu0
    %672 = vmatprep.subr.mxu0 0.0
    %v673 = vand.u32 %v499, 4294901760
    %v674 = vsub.f32 %v499, %v673
    %675 = vmatpush1.msra.mxu0 %v674
    %676 = vmatprep.subr.mxu0 0.0
    %v677 = vand.u32 %v512, 4294901760
    %v678 = vsub.f32 %v512, %v677
    %679 = vmatpush1.msra.mxu0 %v678
    %680 = vmatprep.subr.mxu0 0.0
    %681 = vmatpush1.msra.mxu0 0.0
    %682 = vmatprep.subr.mxu0 0.0
    %683 = vmatpush1.msra.mxu0 0.0
    %684 = vmatprep.subr.mxu0 0.0
    %685 = vmatpush1.msra.mxu0 0.0
    %686 = vmatprep.subr.mxu0 0.0
    %687 = vmatpush1.msra.mxu0 0.0
    %688 = vmatprep.subr.mxu0 0.0
    %689 = vmatpush1.msra.mxu0 0.0
    %690 = vmatprep.subr.mxu0 0.0
    %691 = vmatpush1.msra.mxu0 0.0
    %692 = vmatprep.subr.mxu0 0.0
    %693 = vmatpush1.msra.mxu0 0.0
    %694 = vmatprep.subr.mxu0 0.0
    %695 = vmatpush1.msra.mxu0 0.0
    %696 = vmatprep.subr.mxu0 0.0
    %697 = vmatpush1.msra.mxu0 0.0
    %698 = vmatprep.subr.mxu0 0.0
    %699 = vmatpush1.msra.mxu0 0.0
    %700 = vmatprep.subr.mxu0 0.0
    %701 = vmatpush1.msra.mxu0 0.0
    %702 = vmatprep.subr.mxu0 0.0
    %703 = vmatpush1.msra.mxu0 0.0
    %704 = vmatprep.subr.mxu0 0.0
    %705 = vmatpush1.msra.mxu0 0.0
    %706 = vmatprep.subr.mxu0 0.0
    %707 = vmatpush1.msra.mxu0 0.0
    %708 = vmatprep.subr.mxu0 0.0
    %709 = vmatpush1.msra.mxu0 0.0
    %710 = vmatprep.subr.mxu0 0.0
    %711 = vmatpush1.msra.mxu0 0.0
    %712 = vmatprep.subr.mxu0 0.0
    %713 = vmatpush1.msra.mxu0 0.0
    %714 = vmatprep.subr.mxu0 0.0
    %715 = vmatpush1.msra.mxu0 0.0
    %716 = vmatprep.subr.mxu0 0.0
    %717 = vmatpush1.msra.mxu0 0.0
    %718 = vmatprep.subr.mxu0 0.0
    %719 = vmatpush1.msra.mxu0 0.0
    %720 = vmatprep.subr.mxu0 0.0
    %721 = vmatpush1.msra.mxu0 0.0
    %722 = vmatprep.subr.mxu0 0.0
    %723 = vmatpush1.msra.mxu0 0.0
    %724 = vmatprep.subr.mxu0 0.0
    %725 = vmatpush1.msra.mxu0 0.0
    %726 = vmatprep.subr.mxu0 0.0
    %727 = vmatpush1.msra.mxu0 0.0
    %728 = vmatprep.subr.mxu0 0.0
    %729 = vmatpush1.msra.mxu0 0.0
    %730 = vmatprep.subr.mxu0 0.0
    %731 = vmatpush1.msra.mxu0 0.0
    %732 = vmatprep.subr.mxu0 0.0
    %733 = vmatpush1.msra.mxu0 0.0
    %734 = vmatprep.subr.mxu0 0.0
    %735 = vmatpush1.msra.mxu0 0.0
    %736 = vmatprep.subr.mxu0 0.0
    %737 = vmatpush1.msra.mxu0 0.0
    %738 = vmatprep.subr.mxu0 0.0
    %739 = vmatpush1.msra.mxu0 0.0
    %740 = vmatprep.mubr.f32.mxu0 0.0
    %v741 = vand.u32 %v509, 4294901760
    %v742 = vsub.f32 %v509, %v741
    %743 = vmatmul.mubr.f32.gmra.mrb[0].mxu0 %v742
    %v744 = vpop.f32.mrb[0].mxu0
    %v745 = vadd.f32 %v669, %v744
    %v746 = vpop.f32.mrb[0].mxu0
    %747 = vdwg.mxu0
    %748 = vmatprep.subr.mxu0 0.0
    %v749 = vand.u32 %v499, 4294901760
    %750 = vmatpush1.msra.mxu0 %v749
    %751 = vmatprep.subr.mxu0 0.0
    %v752 = vand.u32 %v512, 4294901760
    %753 = vmatpush1.msra.mxu0 %v752
    %754 = vmatprep.subr.mxu0 0.0
    %755 = vmatpush1.msra.mxu0 0.0
    %756 = vmatprep.subr.mxu0 0.0
    %757 = vmatpush1.msra.mxu0 0.0
    %758 = vmatprep.subr.mxu0 0.0
    %759 = vmatpush1.msra.mxu0 0.0
    %760 = vmatprep.subr.mxu0 0.0
    %761 = vmatpush1.msra.mxu0 0.0
    %762 = vmatprep.subr.mxu0 0.0
    %763 = vmatpush1.msra.mxu0 0.0
    %764 = vmatprep.subr.mxu0 0.0
    %765 = vmatpush1.msra.mxu0 0.0
    %766 = vmatprep.subr.mxu0 0.0
    %767 = vmatpush1.msra.mxu0 0.0
    %768 = vmatprep.subr.mxu0 0.0
    %769 = vmatpush1.msra.mxu0 0.0
    %770 = vmatprep.subr.mxu0 0.0
    %771 = vmatpush1.msra.mxu0 0.0
    %772 = vmatprep.subr.mxu0 0.0
    %773 = vmatpush1.msra.mxu0 0.0
    %774 = vmatprep.subr.mxu0 0.0
    %775 = vmatpush1.msra.mxu0 0.0
    %776 = vmatprep.subr.mxu0 0.0
    %777 = vmatpush1.msra.mxu0 0.0
    %778 = vmatprep.subr.mxu0 0.0
    %779 = vmatpush1.msra.mxu0 0.0
    %780 = vmatprep.subr.mxu0 0.0
    %781 = vmatpush1.msra.mxu0 0.0
    %782 = vmatprep.subr.mxu0 0.0
    %783 = vmatpush1.msra.mxu0 0.0
    %784 = vmatprep.subr.mxu0 0.0
    %785 = vmatpush1.msra.mxu0 0.0
    %786 = vmatprep.subr.mxu0 0.0
    %787 = vmatpush1.msra.mxu0 0.0
    %788 = vmatprep.subr.mxu0 0.0
    %789 = vmatpush1.msra.mxu0 0.0
    %790 = vmatprep.subr.mxu0 0.0
    %791 = vmatpush1.msra.mxu0 0.0
    %792 = vmatprep.subr.mxu0 0.0
    %793 = vmatpush1.msra.mxu0 0.0
    %794 = vmatprep.subr.mxu0 0.0
    %795 = vmatpush1.msra.mxu0 0.0
    %796 = vmatprep.subr.mxu0 0.0
    %797 = vmatpush1.msra.mxu0 0.0
    %798 = vmatprep.subr.mxu0 0.0
    %799 = vmatpush1.msra.mxu0 0.0
    %800 = vmatprep.subr.mxu0 0.0
    %801 = vmatpush1.msra.mxu0 0.0
    %802 = vmatprep.subr.mxu0 0.0
    %803 = vmatpush1.msra.mxu0 0.0
    %804 = vmatprep.subr.mxu0 0.0
    %805 = vmatpush1.msra.mxu0 0.0
    %806 = vmatprep.subr.mxu0 0.0
    %807 = vmatpush1.msra.mxu0 0.0
    %808 = vmatprep.subr.mxu0 0.0
    %809 = vmatpush1.msra.mxu0 0.0
    %810 = vmatprep.subr.mxu0 0.0
    %811 = vmatpush1.msra.mxu0 0.0
    %812 = vmatprep.subr.mxu0 0.0
    %813 = vmatpush1.msra.mxu0 0.0
    %814 = vmatprep.mubr.f32.mxu0 0.0
    %v815 = vand.u32 %v509, 4294901760
    %v816 = vsub.f32 %v509, %v815
    %v817 = vand.u32 %v816, 4294901760
    %818 = vmatmul.mubr.f32.gmra.mrb[0].mxu0 %v817
    %v819 = vpop.f32.mrb[0].mxu0
    %v820 = vadd.f32 %v745, %v819
    %v821 = vpop.f32.mrb[0].mxu0
    %822 = vdwg.mxu0
    %823 = vmatprep.subr.mxu0 0.0
    %v824 = vand.u32 %v499, 4294901760
    %v825 = vsub.f32 %v499, %v824
    %v826 = vand.u32 %v825, 4294901760
    %827 = vmatpush1.msra.mxu0 %v826
    %828 = vmatprep.subr.mxu0 0.0
    %v829 = vand.u32 %v512, 4294901760
    %v830 = vsub.f32 %v512, %v829
    %v831 = vand.u32 %v830, 4294901760
    %832 = vmatpush1.msra.mxu0 %v831
    %833 = vmatprep.subr.mxu0 0.0
    %834 = vmatpush1.msra.mxu0 0.0
    %835 = vmatprep.subr.mxu0 0.0
    %836 = vmatpush1.msra.mxu0 0.0
    %837 = vmatprep.subr.mxu0 0.0
    %838 = vmatpush1.msra.mxu0 0.0
    %839 = vmatprep.subr.mxu0 0.0
    %840 = vmatpush1.msra.mxu0 0.0
    %841 = vmatprep.subr.mxu0 0.0
    %842 = vmatpush1.msra.mxu0 0.0
    %843 = vmatprep.subr.mxu0 0.0
    %844 = vmatpush1.msra.mxu0 0.0
    %845 = vmatprep.subr.mxu0 0.0
    %846 = vmatpush1.msra.mxu0 0.0
    %847 = vmatprep.subr.mxu0 0.0
    %848 = vmatpush1.msra.mxu0 0.0
    %849 = vmatprep.subr.mxu0 0.0
    %850 = vmatpush1.msra.mxu0 0.0
    %851 = vmatprep.subr.mxu0 0.0
    %852 = vmatpush1.msra.mxu0 0.0
    %853 = vmatprep.subr.mxu0 0.0
    %854 = vmatpush1.msra.mxu0 0.0
    %855 = vmatprep.subr.mxu0 0.0
    %856 = vmatpush1.msra.mxu0 0.0
    %857 = vmatprep.subr.mxu0 0.0
    %858 = vmatpush1.msra.mxu0 0.0
    %859 = vmatprep.subr.mxu0 0.0
    %860 = vmatpush1.msra.mxu0 0.0
    %861 = vmatprep.subr.mxu0 0.0
    %862 = vmatpush1.msra.mxu0 0.0
    %863 = vmatprep.subr.mxu0 0.0
    %864 = vmatpush1.msra.mxu0 0.0
    %865 = vmatprep.subr.mxu0 0.0
    %866 = vmatpush1.msra.mxu0 0.0
    %867 = vmatprep.subr.mxu0 0.0
    %868 = vmatpush1.msra.mxu0 0.0
    %869 = vmatprep.subr.mxu0 0.0
    %870 = vmatpush1.msra.mxu0 0.0
    %871 = vmatprep.subr.mxu0 0.0
    %872 = vmatpush1.msra.mxu0 0.0
    %873 = vmatprep.subr.mxu0 0.0
    %874 = vmatpush1.msra.mxu0 0.0
    %875 = vmatprep.subr.mxu0 0.0
    %876 = vmatpush1.msra.mxu0 0.0
    %877 = vmatprep.subr.mxu0 0.0
    %878 = vmatpush1.msra.mxu0 0.0
    %879 = vmatprep.subr.mxu0 0.0
    %880 = vmatpush1.msra.mxu0 0.0
    %881 = vmatprep.subr.mxu0 0.0
    %882 = vmatpush1.msra.mxu0 0.0
    %883 = vmatprep.subr.mxu0 0.0
    %884 = vmatpush1.msra.mxu0 0.0
    %885 = vmatprep.subr.mxu0 0.0
    %886 = vmatpush1.msra.mxu0 0.0
    %887 = vmatprep.subr.mxu0 0.0
    %888 = vmatpush1.msra.mxu0 0.0
    %889 = vmatprep.subr.mxu0 0.0
    %890 = vmatpush1.msra.mxu0 0.0
    %891 = vmatprep.subr.mxu0 0.0
    %892 = vmatpush1.msra.mxu0 0.0
    %893 = vmatprep.mubr.f32.mxu0 0.0
    %v894 = vand.u32 %v509, 4294901760
    %895 = vmatmul.mubr.f32.gmra.mrb[0].mxu0 %v894
    %v896 = vpop.f32.mrb[0].mxu0
    %v897 = vadd.f32 %v820, %v896
    %v898 = vpop.f32.mrb[0].mxu0
    %899 = vdwg.mxu0
    %900 = vmatprep.subr.mxu0 0.0
    %v901 = vand.u32 %v499, 4294901760
    %902 = vmatpush1.msra.mxu0 %v901
    %903 = vmatprep.subr.mxu0 0.0
    %v904 = vand.u32 %v512, 4294901760
    %905 = vmatpush1.msra.mxu0 %v904
    %906 = vmatprep.subr.mxu0 0.0
    %907 = vmatpush1.msra.mxu0 0.0
    %908 = vmatprep.subr.mxu0 0.0
    %909 = vmatpush1.msra.mxu0 0.0
    %910 = vmatprep.subr.mxu0 0.0
    %911 = vmatpush1.msra.mxu0 0.0
    %912 = vmatprep.subr.mxu0 0.0
    %913 = vmatpush1.msra.mxu0 0.0
    %914 = vmatprep.subr.mxu0 0.0
    %915 = vmatpush1.msra.mxu0 0.0
    %916 = vmatprep.subr.mxu0 0.0
    %917 = vmatpush1.msra.mxu0 0.0
    %918 = vmatprep.subr.mxu0 0.0
    %919 = vmatpush1.msra.mxu0 0.0
    %920 = vmatprep.subr.mxu0 0.0
    %921 = vmatpush1.msra.mxu0 0.0
    %922 = vmatprep.subr.mxu0 0.0
    %923 = vmatpush1.msra.mxu0 0.0
    %924 = vmatprep.subr.mxu0 0.0
    %925 = vmatpush1.msra.mxu0 0.0
    %926 = vmatprep.subr.mxu0 0.0
    %927 = vmatpush1.msra.mxu0 0.0
    %928 = vmatprep.subr.mxu0 0.0
    %929 = vmatpush1.msra.mxu0 0.0
    %930 = vmatprep.subr.mxu0 0.0
    %931 = vmatpush1.msra.mxu0 0.0
    %932 = vmatprep.subr.mxu0 0.0
    %933 = vmatpush1.msra.mxu0 0.0
    %934 = vmatprep.subr.mxu0 0.0
    %935 = vmatpush1.msra.mxu0 0.0
    %936 = vmatprep.subr.mxu0 0.0
    %937 = vmatpush1.msra.mxu0 0.0
    %938 = vmatprep.subr.mxu0 0.0
    %939 = vmatpush1.msra.mxu0 0.0
    %940 = vmatprep.subr.mxu0 0.0
    %941 = vmatpush1.msra.mxu0 0.0
    %942 = vmatprep.subr.mxu0 0.0
    %943 = vmatpush1.msra.mxu0 0.0
    %944 = vmatprep.subr.mxu0 0.0
    %945 = vmatpush1.msra.mxu0 0.0
    %946 = vmatprep.subr.mxu0 0.0
    %947 = vmatpush1.msra.mxu0 0.0
    %948 = vmatprep.subr.mxu0 0.0
    %949 = vmatpush1.msra.mxu0 0.0
    %950 = vmatprep.subr.mxu0 0.0
    %951 = vmatpush1.msra.mxu0 0.0
    %952 = vmatprep.subr.mxu0 0.0
    %953 = vmatpush1.msra.mxu0 0.0
    %954 = vmatprep.subr.mxu0 0.0
    %955 = vmatpush1.msra.mxu0 0.0
    %956 = vmatprep.subr.mxu0 0.0
    %957 = vmatpush1.msra.mxu0 0.0
    %958 = vmatprep.subr.mxu0 0.0
    %959 = vmatpush1.msra.mxu0 0.0
    %960 = vmatprep.subr.mxu0 0.0
    %961 = vmatpush1.msra.mxu0 0.0
    %962 = vmatprep.subr.mxu0 0.0
    %963 = vmatpush1.msra.mxu0 0.0
    %964 = vmatprep.subr.mxu0 0.0
    %965 = vmatpush1.msra.mxu0 0.0
    %966 = vmatprep.mubr.f32.mxu0 0.0
    %v967 = vand.u32 %v509, 4294901760
    %968 = vmatmul.mubr.f32.gmra.mrb[0].mxu0 %v967
    %v969 = vpop.f32.mrb[0].mxu0
    %v970 = vadd.f32 %v897, %v969
    %v971 = vpop.f32.mrb[0].mxu0
    %972 = vdwg.mxu0
    %vm973 = vcmask 39936
    %974 = vst.msk [vmem:[#allocation2] sm:$0xff] %vm973, %v970
    // Predicated region
    $region22: #{_forward_pallas.1} parent=1 // pred_check
      _
    $region23: #{_forward_pallas.1} parent=1 // pred_check_branch
      %976 = sbr.rel (0) target = $region25
    $region24: #{_forward_pallas.1} parent=1 // pred_region
      %s978 = ssub.s32 128, 128
      %979 = vsyncadd [#allocation3], %s978
      %s981 = sshll.u32 [#allocation2], 4
      %s982 = int_to_ptr.vmem [resolvable:$true] %s981
      %984 = dma.vmem_to_hbm [thread:$0]  %s982, 128, %s5, [#allocation3]
    $region25: #{_forward_pallas.1} parent=1 // pred_fallthru
      _
    // Predicated region
    $region26: #{_forward_pallas.1} parent=1 // pred_check
      _
    $region27: #{_forward_pallas.1} parent=1 // pred_check_branch
      %986 = sbr.rel (0) target = $region29
    $region28: #{_forward_pallas.1} parent=1 // pred_region
      %987 = dma.done [#allocation3], 128
    $region29: #{_forward_pallas.1} parent=1 // pred_fallthru
      _
    %988 = vsyncpa [#allocation3], 1

</llo_original>
